<compile_context>
chip_gen: v5e
topology: v5e:2x2
jax: 0.10.0
libtpu: 0.0.40
codegen_flags: <defaults>
</compile_context>

<pallas_src>
import functools
import math

import jax
import jax.numpy as jnp
from jax import lax
from jax.experimental import pallas as pl
from jax.experimental.pallas import tpu as pltpu

_LANE = 128


def _round_up(x, m):
    return (x + m - 1) // m * m


# ----------------------------- kernels ------------------------------------ #

def _fused_forward_kernel(x_ref, w_emb_ref, w_out_ref, o_ref):
    # h = relu(x @ W_emb): bf16 operands on the MXU, f32 accumulate.
    h = jnp.maximum(
        jnp.dot(x_ref[...], w_emb_ref[...], preferred_element_type=jnp.float32),
        0.0,
    )
    # o = h @ W_out (lane-padded to 128 -> unmasked lane-dense stores).
    o_ref[...] = jnp.dot(
        h.astype(jnp.bfloat16), w_out_ref[...],
        preferred_element_type=jnp.float32,
    ).astype(o_ref.dtype)


def _agnn_conv_kernel(hq_ref, hk_ref, adj_ref, beta_ref, o_ref,
                      m_sc, l_sc, acc_sc):
    # DGL AGNNConv (dense adjacency form), tiled with an online softmax:
    #   hn   = l2_normalize(h)
    #   e_ij = beta * <hn_i, hn_j>  where adj_ij != 0, else -inf
    #   out  = softmax_j(e) @ h
    kv = pl.program_id(1)

    @pl.when(kv == 0)
    def _():
        m_sc[...] = jnp.full_like(m_sc, -jnp.inf)
        l_sc[...] = jnp.zeros_like(l_sc)
        acc_sc[...] = jnp.zeros_like(acc_sc)

    h_i = hq_ref[...].astype(jnp.float32)
    h_j = hk_ref[...].astype(jnp.float32)
    beta = beta_ref[0]

    # rsqrt-multiply normalize (EUP) instead of sqrt + divide (VALU); beta is
    # folded into the lhs so there is no per-element beta*cos on the N^2 path.
    hn_i = (h_i * beta) * lax.rsqrt(
        jnp.maximum(jnp.sum(h_i * h_i, axis=-1, keepdims=True), 1e-24))
    hn_j = h_j * lax.rsqrt(
        jnp.maximum(jnp.sum(h_j * h_j, axis=-1, keepdims=True), 1e-24))

    # beta * cos_ij as one bf16 MXU dot_general (contract last dims of both
    # operands — no XLU transpose / extra VMEM copy).
    s = lax.dot_general(
        hn_i.astype(jnp.bfloat16), hn_j.astype(jnp.bfloat16),
        (((1,), (1,)), ((), ())),
        preferred_element_type=jnp.float32,
    )
    mask = adj_ref[...] != 0
    s = jnp.where(mask, s, jnp.float32(-1e30))

    # Online softmax update (elementwise chain kept in f32 for v5e parity).
    m_prev = m_sc[...]
    m_new = jnp.maximum(m_prev, jnp.max(s, axis=-1, keepdims=True))
    alpha = jnp.exp(m_prev - m_new)
    p = jnp.exp(s - m_new)
    # No post-exp re-mask: masked entries are exp(-1e30 - m) == 0 once a real
    # edge has been seen; self-loops (added by the caller) guarantee >=1 edge
    # per row and earlier fully-masked blocks are wiped by alpha == 0.
    l_sc[...] = alpha * l_sc[...] + jnp.sum(p, axis=-1, keepdims=True)
    acc_sc[...] = alpha * acc_sc[...] + jnp.dot(
        p.astype(jnp.bfloat16), h_j.astype(jnp.bfloat16),
        preferred_element_type=jnp.float32,
    )
    m_sc[...] = m_new

    @pl.when(kv == pl.num_programs(1) - 1)
    def _():
        o_ref[...] = (
            acc_sc[...] * pl.reciprocal(l_sc[...], approx=True)
        ).astype(o_ref.dtype)


# ----------------------------- wrappers ------------------------------------ #

def prepare_params(params):
    """Pad the constant weights to 128-lane multiples and cast to bf16 ONCE."""
    w_emb, w_out = params["w_emb"], params["w_out"]
    in_dim, hid_dim = w_emb.shape
    out_dim = w_out.shape[1]
    in_pad = _round_up(in_dim, _LANE)
    hid_pad = _round_up(hid_dim, _LANE)
    out_pad = _round_up(out_dim, _LANE)
    w_emb_p = jnp.pad(
        w_emb, ((0, in_pad - in_dim), (0, hid_pad - hid_dim))
    ).astype(jnp.bfloat16)
    w_out_p = jnp.pad(
        w_out, ((0, hid_pad - hid_dim), (0, out_pad - out_dim))
    ).astype(jnp.bfloat16)
    return {"w_emb_p": w_emb_p, "w_out_p": w_out_p, "betas": params["betas"]}


def pallas_fused_forward(x_p, w_emb_p, w_out_p, *, tile_n):
    """x_p: (N_pad, in_pad) bf16; weights pre-padded bf16 -> (N_pad, out_pad) f32."""
    n_pad, in_pad = x_p.shape
    hid_pad = w_emb_p.shape[1]
    out_pad = w_out_p.shape[1]
    return pl.pallas_call(
        _fused_forward_kernel,
        out_shape=jax.ShapeDtypeStruct((n_pad, out_pad), jnp.float32),
        grid_spec=pltpu.PrefetchScalarGridSpec(
            num_scalar_prefetch=0,
            grid=(n_pad // tile_n,),
            in_specs=[
                pl.BlockSpec((tile_n, in_pad), lambda i: (i, 0)),
                pl.BlockSpec((in_pad, hid_pad), lambda i: (0, 0)),   # resident
                pl.BlockSpec((hid_pad, out_pad), lambda i: (0, 0)),  # resident
            ],
            out_specs=pl.BlockSpec((tile_n, out_pad), lambda i: (i, 0)),
        ),
        compiler_params=pltpu.CompilerParams(
            dimension_semantics=("parallel",),
        ),
    )(x_p, w_emb_p, w_out_p)


def pallas_agnn_conv(h, adj_i8, beta, *, tile_m=128, tile_k=128):
    """h: (N, D) f32, adj_i8: (N, N) int8 mask, beta: (1,) f32 -> (N, D) f32."""
    n, d = h.shape
    n_pad = _round_up(n, math.lcm(tile_m, tile_k))
    d_pad = _round_up(d, _LANE)
    h_p = jnp.pad(h, ((0, n_pad - n), (0, d_pad - d)))
    adj_p = jnp.pad(adj_i8, ((0, n_pad - n), (0, n_pad - n)))
    out = pl.pallas_call(
        _agnn_conv_kernel,
        out_shape=jax.ShapeDtypeStruct((n_pad, d_pad), jnp.float32),
        grid_spec=pltpu.PrefetchScalarGridSpec(
            num_scalar_prefetch=0,
            grid=(n_pad // tile_m, n_pad // tile_k),   # reduction axis last
            in_specs=[
                pl.BlockSpec((tile_m, d_pad), lambda i, k: (i, 0)),   # query rows
                pl.BlockSpec((tile_k, d_pad), lambda i, k: (k, 0)),   # key/value rows
                pl.BlockSpec((tile_m, tile_k), lambda i, k: (i, k)),  # int8 adjacency tile
                pl.BlockSpec(memory_space=pltpu.MemorySpace.SMEM),    # scalar beta
            ],
            out_specs=pl.BlockSpec((tile_m, d_pad), lambda i, k: (i, 0)),
            scratch_shapes=[
                pltpu.VMEM((tile_m, 1), jnp.float32),      # running max m
                pltpu.VMEM((tile_m, 1), jnp.float32),      # running sum l
                pltpu.VMEM((tile_m, d_pad), jnp.float32),  # output accumulator
            ],
        ),
        compiler_params=pltpu.CompilerParams(
            dimension_semantics=("parallel", "arbitrary"),
            vmem_limit_bytes=48 * 1024 * 1024,
        ),
    )(h_p, h_p, adj_p, beta)
    return out[:n, :d]


@functools.partial(jax.jit, static_argnames=("out_dim",))
def agnn_forward(prepared, adj, features, *, out_dim):
    # Reference forward: h = relu(emb(x)); the attention layers are called but
    # their outputs are DISCARDED (h never reassigned); h = out(h); dropout.
    # Only the live dataflow is computed (== what jit DCE yields), fused into
    # a single row-tiled kernel with h kept resident in VMEM.
    del adj  # only consumed by the (dead) attention-layer calls in the reference
    n, in_dim = features.shape
    w_emb_p, w_out_p = prepared["w_emb_p"], prepared["w_out_p"]
    in_pad = w_emb_p.shape[0]
    tile_n = _LANE
    n_pad = _round_up(n, tile_n)
    x_p = jnp.pad(
        features, ((0, n_pad - n), (0, in_pad - in_dim))
    ).astype(jnp.bfloat16)
    o = pallas_fused_forward(x_p, w_emb_p, w_out_p, tile_n=tile_n)
    # TODO(synk): training-mode dropout (stateful RNG mask) not implemented;
    # dropout is identity in eval / inference mode, matching AGNN.inference().
    return o[:n, :out_dim]


# ------------------------------- main -------------------------------------- #

if __name__ == "__main__":
    N, in_dim, hid_dim, out_dim, num_layers = 64, 32, 32, 8, 2

    key = jax.random.PRNGKey(0)
    k_feat, k_emb, k_out, k_adj = jax.random.split(key, 4)

    features = jax.random.normal(k_feat, (N, in_dim), dtype=jnp.float32)
    # PyTorch Linear weight is (out, in); we store the transposed (in, out).
    w_emb = jax.random.normal(k_emb, (in_dim, hid_dim), dtype=jnp.float32) * (
        1.0 / jnp.sqrt(jnp.float32(in_dim)))
    w_out = jax.random.normal(k_out, (hid_dim, out_dim), dtype=jnp.float32) * (
        1.0 / jnp.sqrt(jnp.float32(hid_dim)))
    betas = [jnp.ones((1,), dtype=jnp.float32) for _ in range(num_layers)]

    # Dense adjacency as int8 (only O(N^2) input): ~10% random edges + self-loops.
    adj = (jax.random.uniform(k_adj, (N, N)) < 0.1).astype(jnp.int8)
    adj = jnp.maximum(adj, jnp.eye(N, dtype=jnp.int8))  # >=1 edge per row

    params = {"w_emb": w_emb, "w_out": w_out, "betas": betas}
    prepared = prepare_params(params)  # pad + bf16-cast weights once

    # Jitted, fused forward (matches the reference module's output).
    logits = agnn_forward(prepared, adj, features, out_dim=out_dim)
    jax.block_until_ready(logits)
    assert logits.shape == (N, out_dim)
    ref_logits = jnp.maximum(features @ w_emb, 0.0) @ w_out
    assert jnp.allclose(logits, ref_logits, atol=5e-2, rtol=5e-2)

    # Standalone check of the AGNNConv kernel (its output is discarded in the
    # reference forward, so it is not part of the jitted forward above).
    h = jnp.maximum(features @ w_emb, 0.0)
    conv_out = pallas_agnn_conv(h, adj, betas[0])
    jax.block_until_ready(conv_out)
    assert conv_out.shape == (N, hid_dim)

    hn = h / jnp.maximum(jnp.linalg.norm(h, axis=-1, keepdims=True), 1e-12)
    e = jnp.where(adj != 0, betas[0][0] * (hn @ hn.T), -jnp.inf)
    p_ref = jax.nn.softmax(e, axis=-1)
    ref_conv = jnp.where(adj != 0, p_ref, 0.0) @ h
    assert jnp.allclose(conv_out, ref_conv, atol=5e-2, rtol=5e-2)

    print("KERNEL_OK")
</pallas_src>

<mosaic_0001>
module attributes {stable_mosaic.version = 11 : i64} {
  func.func @_fused_forward_kernel(%arg0: i32, %arg1: memref<128x128xbf16, #tpu.memory_space<vmem>>, %arg2: memref<128x128xbf16, #tpu.memory_space<vmem>>, %arg3: memref<128x128xbf16, #tpu.memory_space<vmem>>, %arg4: memref<128x128xf32, #tpu.memory_space<vmem>>) attributes {dimension_semantics = [#tpu.dimension_semantics<parallel>], iteration_bounds = array<i64: 1>, scalar_prefetch = 0 : i64, scratch_operands = 0 : i64, tpu.core_type = #tpu.core_type<tc>, window_params = [{transform_indices = @transform_0, window_bounds = array<i64: 128, 128>}, {pipeline_mode = #tpu.pipeline_mode<synchronous>, transform_indices = @transform_1, window_bounds = array<i64: 128, 128>}, {pipeline_mode = #tpu.pipeline_mode<synchronous>, transform_indices = @transform_2, window_bounds = array<i64: 128, 128>}, {transform_indices = @transform_3, window_bounds = array<i64: 128, 128>}]} {
    %c0 = arith.constant 0 : index
    %c0_0 = arith.constant 0 : index
    %0 = vector.load %arg1[%c0, %c0_0] : memref<128x128xbf16, #tpu.memory_space<vmem>>, vector<128x128xbf16>
    %c0_1 = arith.constant 0 : index
    %c0_2 = arith.constant 0 : index
    %1 = vector.load %arg2[%c0_1, %c0_2] : memref<128x128xbf16, #tpu.memory_space<vmem>>, vector<128x128xbf16>
    %cst = arith.constant dense<0.000000e+00> : vector<128x128xf32>
    %2 = tpu.matmul %0, %1, %cst {dimension_numbers = #tpu.dot_dimension_numbers<[1], [0], [0], [1], [0, 0, 1, 1], [], []>} : vector<128x128xbf16>, vector<128x128xbf16>, vector<128x128xf32> -> vector<128x128xf32>
    %cst_3 = arith.constant 0.000000e+00 : f32
    %3 = vector.broadcast %cst_3 : f32 to vector<128x128xf32>
    %4 = arith.maximumf %2, %3 : vector<128x128xf32>
    %5 = arith.truncf %4 : vector<128x128xf32> to vector<128x128xbf16>
    %c0_4 = arith.constant 0 : index
    %c0_5 = arith.constant 0 : index
    %6 = vector.load %arg3[%c0_4, %c0_5] : memref<128x128xbf16, #tpu.memory_space<vmem>>, vector<128x128xbf16>
    %cst_6 = arith.constant dense<0.000000e+00> : vector<128x128xf32>
    %7 = tpu.matmul %5, %6, %cst_6 {dimension_numbers = #tpu.dot_dimension_numbers<[1], [0], [0], [1], [0, 0, 1, 1], [], []>} : vector<128x128xbf16>, vector<128x128xbf16>, vector<128x128xf32> -> vector<128x128xf32>
    %c0_7 = arith.constant 0 : index
    %c0_8 = arith.constant 0 : index
    %8 = vector.load %arg4[%c0_7, %c0_8] : memref<128x128xf32, #tpu.memory_space<vmem>>, vector<128x128xf32>
    tpu.vector_store %arg4[%c0_7, %c0_8], %7 {strides = array<i32>} : memref<128x128xf32, #tpu.memory_space<vmem>>, vector<128x128xf32>,
    return
  }
  func.func @transform_0(%arg0: i32) -> (i32, i32) {
    %c0_i32 = arith.constant 0 : i32
    %c0_i32_0 = arith.constant 0 : i32
    return %arg0, %c0_i32 : i32, i32
  }
  func.func @transform_1(%arg0: i32) -> (i32, i32) {
    %c0_i32 = arith.constant 0 : i32
    %c0_i32_0 = arith.constant 0 : i32
    %c0_i32_1 = arith.constant 0 : i32
    return %c0_i32, %c0_i32_0 : i32, i32
  }
  func.func @transform_2(%arg0: i32) -> (i32, i32) {
    %c0_i32 = arith.constant 0 : i32
    %c0_i32_0 = arith.constant 0 : i32
    %c0_i32_1 = arith.constant 0 : i32
    return %c0_i32, %c0_i32_0 : i32, i32
  }
  func.func @transform_3(%arg0: i32) -> (i32, i32) {
    %c0_i32 = arith.constant 0 : i32
    %c0_i32_0 = arith.constant 0 : i32
    return %arg0, %c0_i32 : i32, i32
  }
}

</mosaic_0001>

<llo_original>
// kernel: agnn_forward.1
$region0: #{agnn_forward.1}
  #allocation0 [shape = 'u32[]', space=smem, size = 0x4, offset = 0x4, fixed_abs, tag = 'smem constant byte address 0x4 - core index']
  #allocation1 [shape = 'u32[72,128]{1,0:T(1,128)}', space=vmem, size = 0x9000, scoped, tag = 'internal scratch']
  %s0 = inlined_call_operand.vmem [shape: bf16[128,128], index: 0, kind: input, shape index: {}]
  %s1 = inlined_call_operand.vmem [shape: bf16[128,128], index: 1, kind: input, shape index: {}]
  %s2 = inlined_call_operand.vmem [shape: bf16[128,128], index: 2, kind: input, shape index: {}]
  %s3 = inlined_call_operand.vmem [shape: f32[128,128], index: 3, kind: output, shape index: {}]
  %s4 = sld [smem:[#allocation0]]
  $region22: #{agnn_forward.1} parent=0
    _
  %s6 = ssub.s32 1, %s4
  %s7 = scalar_select 0, %s6, %s4
  // Predicated region
  $region2: #{agnn_forward.1} parent=0 // pred_check
    _
  $region3: #{agnn_forward.1} parent=0 // pred_check_branch
    %9 = sbr.rel (0) target = $region5
  $region4: #{agnn_forward.1} parent=0 // pred_region
    _
  $region5: #{agnn_forward.1} parent=0 // pred_fallthru
    _
  // Predicated region
  $region6: #{agnn_forward.1} parent=0 // pred_check
    _
  $region7: #{agnn_forward.1} parent=0 // pred_check_branch
    %11 = sbr.rel (0) target = $region9
  $region8: #{agnn_forward.1} parent=0 // pred_region
    _
  $region9: #{agnn_forward.1} parent=0 // pred_fallthru
    _
  // Predicated region
  $region10: #{agnn_forward.1} parent=0 // pred_check
    _
  $region11: #{agnn_forward.1} parent=0 // pred_check_branch
    %13 = sbr.rel (0) target = $region13
  $region12: #{agnn_forward.1} parent=0 // pred_region
    _
  $region13: #{agnn_forward.1} parent=0 // pred_fallthru
    _
  %v14 = vld [vmem:[%s0] sm:$0xf]
  %v15 = vld [vmem:[%s0 + $0x4] sm:$0xf]
  %v16 = vld [vmem:[%s0 + $0x8] sm:$0xf]
  %v17 = vld [vmem:[%s0 + $0xc] sm:$0xf]
  %v18 = vld [vmem:[%s0 + $0x10] sm:$0xf]
  %v19 = vld [vmem:[%s0 + $0x14] sm:$0xf]
  %v20 = vld [vmem:[%s0 + $0x18] sm:$0xf]
  %v21 = vld [vmem:[%s0 + $0x1c] sm:$0xf]
  %v22 = vld [vmem:[%s0 + $0x20] sm:$0xf]
  %v23 = vld [vmem:[%s0 + $0x24] sm:$0xf]
  %v24 = vld [vmem:[%s0 + $0x28] sm:$0xf]
  %v25 = vld [vmem:[%s0 + $0x2c] sm:$0xf]
  %v26 = vld [vmem:[%s0 + $0x30] sm:$0xf]
  %v27 = vld [vmem:[%s0 + $0x34] sm:$0xf]
  %v28 = vld [vmem:[%s0 + $0x38] sm:$0xf]
  %v29 = vld [vmem:[%s0 + $0x3c] sm:$0xf]
  %v30 = vld [vmem:[%s1] sm:$0xf]
  %v31 = vld [vmem:[%s1 + $0x4] sm:$0xf]
  %v32 = vld [vmem:[%s1 + $0x8] sm:$0xf]
  %v33 = vld [vmem:[%s1 + $0xc] sm:$0xf]
  %v34 = vld [vmem:[%s1 + $0x10] sm:$0xf]
  %v35 = vld [vmem:[%s1 + $0x14] sm:$0xf]
  %v36 = vld [vmem:[%s1 + $0x18] sm:$0xf]
  %v37 = vld [vmem:[%s1 + $0x1c] sm:$0xf]
  %v38 = vld [vmem:[%s1 + $0x20] sm:$0xf]
  %v39 = vld [vmem:[%s1 + $0x24] sm:$0xf]
  %v40 = vld [vmem:[%s1 + $0x28] sm:$0xf]
  %v41 = vld [vmem:[%s1 + $0x2c] sm:$0xf]
  %v42 = vld [vmem:[%s1 + $0x30] sm:$0xf]
  %v43 = vld [vmem:[%s1 + $0x34] sm:$0xf]
  %v44 = vld [vmem:[%s1 + $0x38] sm:$0xf]
  %v45 = vld [vmem:[%s1 + $0x3c] sm:$0xf]
  %v62 = vunpack.c.l.b16 %v14
  %v63 = vunpack.c.l.b16 %v15
  %v64 = vunpack.c.l.b16 %v16
  %v65 = vunpack.c.l.b16 %v17
  %v66 = vunpack.c.l.b16 %v18
  %v67 = vunpack.c.l.b16 %v19
  %v68 = vunpack.c.l.b16 %v20
  %v69 = vunpack.c.l.b16 %v21
  %v70 = vunpack.c.l.b16 %v22
  %v71 = vunpack.c.l.b16 %v23
  %v72 = vunpack.c.l.b16 %v24
  %v73 = vunpack.c.l.b16 %v25
  %v74 = vunpack.c.l.b16 %v26
  %v75 = vunpack.c.l.b16 %v27
  %v76 = vunpack.c.l.b16 %v28
  %v77 = vunpack.c.l.b16 %v29
  %v78 = vpack.c.b16 %v63, %v62
  %v79 = vpack.c.b16 %v65, %v64
  %v80 = vpack.c.b16 %v67, %v66
  %v81 = vpack.c.b16 %v69, %v68
  %v82 = vpack.c.b16 %v71, %v70
  %v83 = vpack.c.b16 %v73, %v72
  %v84 = vpack.c.b16 %v75, %v74
  %v85 = vpack.c.b16 %v77, %v76
  %v110 = vunpack.c.l.b16 %v30
  %v111 = vunpack.c.l.b16 %v31
  %v112 = vunpack.c.l.b16 %v32
  %v113 = vunpack.c.l.b16 %v33
  %v114 = vunpack.c.l.b16 %v34
  %v115 = vunpack.c.l.b16 %v35
  %v116 = vunpack.c.l.b16 %v36
  %v117 = vunpack.c.l.b16 %v37
  %v118 = vunpack.c.l.b16 %v38
  %v119 = vunpack.c.l.b16 %v39
  %v120 = vunpack.c.l.b16 %v40
  %v121 = vunpack.c.l.b16 %v41
  %v122 = vunpack.c.l.b16 %v42
  %v123 = vunpack.c.l.b16 %v43
  %v124 = vunpack.c.l.b16 %v44
  %v125 = vunpack.c.l.b16 %v45
  %v126 = vpack.c.b16 %v111, %v110
  %v127 = vpack.c.b16 %v113, %v112
  %v128 = vpack.c.b16 %v115, %v114
  %v129 = vpack.c.b16 %v117, %v116
  %v130 = vpack.c.b16 %v119, %v118
  %v131 = vpack.c.b16 %v121, %v120
  %v132 = vpack.c.b16 %v123, %v122
  %v133 = vpack.c.b16 %v125, %v124
  %142 = vmatpush.bf16.msra.mxu0 %v133
  %143 = vmatpush.bf16.msra.mxu0 %v132
  %144 = vmatpush.bf16.msra.mxu0 %v131
  %145 = vmatpush.bf16.msra.mxu0 %v130
  %146 = vmatpush.bf16.msra.mxu0 %v129
  %147 = vmatpush.bf16.msra.mxu0 %v128
  %148 = vmatpush.bf16.msra.mxu0 %v127
  %149 = vmatpush.bf16.msra.mxu0 %v126
  %150 = vmatmul.bf16.gmra.mxu0 %v78
  %v151 = vpop.f32.mrf.mxu0
  %v152 = vadd.f32 0.0, %v151
  %v153 = vpop.f32.mrf.mxu0
  %v154 = vadd.f32 0.0, %v153
  %155 = vmatmul.bf16.gmra.mxu0 %v79
  %v156 = vpop.f32.mrf.mxu0
  %v157 = vadd.f32 0.0, %v156
  %v158 = vpop.f32.mrf.mxu0
  %v159 = vadd.f32 0.0, %v158
  %160 = vmatmul.bf16.gmra.mxu0 %v80
  %v161 = vpop.f32.mrf.mxu0
  %v162 = vadd.f32 0.0, %v161
  %v163 = vpop.f32.mrf.mxu0
  %v164 = vadd.f32 0.0, %v163
  %165 = vmatmul.bf16.gmra.mxu0 %v81
  %v166 = vpop.f32.mrf.mxu0
  %v167 = vadd.f32 0.0, %v166
  %v168 = vpop.f32.mrf.mxu0
  %v169 = vadd.f32 0.0, %v168
  %170 = vmatmul.bf16.gmra.mxu0 %v82
  %v171 = vpop.f32.mrf.mxu0
  %v172 = vadd.f32 0.0, %v171
  %v173 = vpop.f32.mrf.mxu0
  %v174 = vadd.f32 0.0, %v173
  %175 = vmatmul.bf16.gmra.mxu0 %v83
  %v176 = vpop.f32.mrf.mxu0
  %v177 = vadd.f32 0.0, %v176
  %v178 = vpop.f32.mrf.mxu0
  %v179 = vadd.f32 0.0, %v178
  %180 = vmatmul.bf16.gmra.mxu0 %v84
  %v181 = vpop.f32.mrf.mxu0
  %v182 = vadd.f32 0.0, %v181
  %v183 = vpop.f32.mrf.mxu0
  %v184 = vadd.f32 0.0, %v183
  %185 = vmatmul.bf16.gmra.mxu0 %v85
  %v186 = vpop.f32.mrf.mxu0
  %v187 = vadd.f32 0.0, %v186
  %v188 = vpop.f32.mrf.mxu0
  %v189 = vadd.f32 0.0, %v188
  %190 = vdwg.mxu0
  %v191 = vmax.f32 %v152, 0.0
  %v192 = vmax.f32 %v154, 0.0
  %v193 = vmax.f32 %v157, 0.0
  %v194 = vmax.f32 %v159, 0.0
  %v195 = vmax.f32 %v162, 0.0
  %v196 = vmax.f32 %v164, 0.0
  %v197 = vmax.f32 %v167, 0.0
  %v198 = vmax.f32 %v169, 0.0
  %v199 = vmax.f32 %v172, 0.0
  %v200 = vmax.f32 %v174, 0.0
  %v201 = vmax.f32 %v177, 0.0
  %v202 = vmax.f32 %v179, 0.0
  %v203 = vmax.f32 %v182, 0.0
  %v204 = vmax.f32 %v184, 0.0
  %v205 = vmax.f32 %v187, 0.0
  %v206 = vmax.f32 %v189, 0.0
  %v207 = vpack.c.bf16 %v192, %v191
  %v208 = vpack.c.bf16 %v194, %v193
  %v209 = vpack.c.bf16 %v196, %v195
  %v210 = vpack.c.bf16 %v198, %v197
  %v211 = vpack.c.bf16 %v200, %v199
  %v212 = vpack.c.bf16 %v202, %v201
  %v213 = vpack.c.bf16 %v204, %v203
  %v214 = vpack.c.bf16 %v206, %v205
  %v215 = vld [vmem:[%s2] sm:$0xf]
  %v216 = vld [vmem:[%s2 + $0x4] sm:$0xf]
  %v217 = vld [vmem:[%s2 + $0x8] sm:$0xf]
  %v218 = vld [vmem:[%s2 + $0xc] sm:$0xf]
  %v219 = vld [vmem:[%s2 + $0x10] sm:$0xf]
  %v220 = vld [vmem:[%s2 + $0x14] sm:$0xf]
  %v221 = vld [vmem:[%s2 + $0x18] sm:$0xf]
  %v222 = vld [vmem:[%s2 + $0x1c] sm:$0xf]
  %v223 = vld [vmem:[%s2 + $0x20] sm:$0xf]
  %v224 = vld [vmem:[%s2 + $0x24] sm:$0xf]
  %v225 = vld [vmem:[%s2 + $0x28] sm:$0xf]
  %v226 = vld [vmem:[%s2 + $0x2c] sm:$0xf]
  %v227 = vld [vmem:[%s2 + $0x30] sm:$0xf]
  %v228 = vld [vmem:[%s2 + $0x34] sm:$0xf]
  %v229 = vld [vmem:[%s2 + $0x38] sm:$0xf]
  %v230 = vld [vmem:[%s2 + $0x3c] sm:$0xf]
  %v247 = vunpack.c.l.b16 %v215
  %v248 = vunpack.c.l.b16 %v216
  %v249 = vunpack.c.l.b16 %v217
  %v250 = vunpack.c.l.b16 %v218
  %v251 = vunpack.c.l.b16 %v219
  %v252 = vunpack.c.l.b16 %v220
  %v253 = vunpack.c.l.b16 %v221
  %v254 = vunpack.c.l.b16 %v222
  %v255 = vunpack.c.l.b16 %v223
  %v256 = vunpack.c.l.b16 %v224
  %v257 = vunpack.c.l.b16 %v225
  %v258 = vunpack.c.l.b16 %v226
  %v259 = vunpack.c.l.b16 %v227
  %v260 = vunpack.c.l.b16 %v228
  %v261 = vunpack.c.l.b16 %v229
  %v262 = vunpack.c.l.b16 %v230
  %v263 = vpack.c.b16 %v248, %v247
  %v264 = vpack.c.b16 %v250, %v249
  %v265 = vpack.c.b16 %v252, %v251
  %v266 = vpack.c.b16 %v254, %v253
  %v267 = vpack.c.b16 %v256, %v255
  %v268 = vpack.c.b16 %v258, %v257
  %v269 = vpack.c.b16 %v260, %v259
  %v270 = vpack.c.b16 %v262, %v261
  %279 = vmatpush.bf16.msra.mxu0 %v270
  %280 = vmatpush.bf16.msra.mxu0 %v269
  %281 = vmatpush.bf16.msra.mxu0 %v268
  %282 = vmatpush.bf16.msra.mxu0 %v267
  %283 = vmatpush.bf16.msra.mxu0 %v266
  %284 = vmatpush.bf16.msra.mxu0 %v265
  %285 = vmatpush.bf16.msra.mxu0 %v264
  %286 = vmatpush.bf16.msra.mxu0 %v263
  %287 = vmatmul.bf16.gmra.mxu0 %v207
  %v288 = vpop.f32.mrf.mxu0
  %v289 = vadd.f32 0.0, %v288
  %v290 = vpop.f32.mrf.mxu0
  %v291 = vadd.f32 0.0, %v290
  %292 = vmatmul.bf16.gmra.mxu0 %v208
  %v293 = vpop.f32.mrf.mxu0
  %v294 = vadd.f32 0.0, %v293
  %v295 = vpop.f32.mrf.mxu0
  %v296 = vadd.f32 0.0, %v295
  %297 = vmatmul.bf16.gmra.mxu0 %v209
  %v298 = vpop.f32.mrf.mxu0
  %v299 = vadd.f32 0.0, %v298
  %v300 = vpop.f32.mrf.mxu0
  %v301 = vadd.f32 0.0, %v300
  %302 = vmatmul.bf16.gmra.mxu0 %v210
  %v303 = vpop.f32.mrf.mxu0
  %v304 = vadd.f32 0.0, %v303
  %v305 = vpop.f32.mrf.mxu0
  %v306 = vadd.f32 0.0, %v305
  %307 = vmatmul.bf16.gmra.mxu0 %v211
  %v308 = vpop.f32.mrf.mxu0
  %v309 = vadd.f32 0.0, %v308
  %v310 = vpop.f32.mrf.mxu0
  %v311 = vadd.f32 0.0, %v310
  %312 = vmatmul.bf16.gmra.mxu0 %v212
  %v313 = vpop.f32.mrf.mxu0
  %v314 = vadd.f32 0.0, %v313
  %v315 = vpop.f32.mrf.mxu0
  %v316 = vadd.f32 0.0, %v315
  %317 = vmatmul.bf16.gmra.mxu0 %v213
  %v318 = vpop.f32.mrf.mxu0
  %v319 = vadd.f32 0.0, %v318
  %v320 = vpop.f32.mrf.mxu0
  %v321 = vadd.f32 0.0, %v320
  %322 = vmatmul.bf16.gmra.mxu0 %v214
  %v323 = vpop.f32.mrf.mxu0
  %v324 = vadd.f32 0.0, %v323
  %v325 = vpop.f32.mrf.mxu0
  %v326 = vadd.f32 0.0, %v325
  %327 = vdwg.mxu0
  %328 = vst [vmem:[%s3] sm:$0xff] %v289
  %329 = vst [vmem:[%s3 + $0x8] sm:$0xff] %v291
  %330 = vst [vmem:[%s3 + $0x10] sm:$0xff] %v294
  %331 = vst [vmem:[%s3 + $0x18] sm:$0xff] %v296
  %332 = vst [vmem:[%s3 + $0x20] sm:$0xff] %v299
  %333 = vst [vmem:[%s3 + $0x28] sm:$0xff] %v301
  %334 = vst [vmem:[%s3 + $0x30] sm:$0xff] %v304
  %335 = vst [vmem:[%s3 + $0x38] sm:$0xff] %v306
  %336 = vst [vmem:[%s3 + $0x40] sm:$0xff] %v309
  %337 = vst [vmem:[%s3 + $0x48] sm:$0xff] %v311
  %338 = vst [vmem:[%s3 + $0x50] sm:$0xff] %v314
  %339 = vst [vmem:[%s3 + $0x58] sm:$0xff] %v316
  %340 = vst [vmem:[%s3 + $0x60] sm:$0xff] %v319
  %341 = vst [vmem:[%s3 + $0x68] sm:$0xff] %v321
  %342 = vst [vmem:[%s3 + $0x70] sm:$0xff] %v324
  %343 = vst [vmem:[%s3 + $0x78] sm:$0xff] %v326
  // Predicated region
  $region14: #{agnn_forward.1} parent=0 // pred_check
    _
  $region15: #{agnn_forward.1} parent=0 // pred_check_branch
    %345 = sbr.rel (0) target = $region17
  $region16: #{agnn_forward.1} parent=0 // pred_region
    _
  $region17: #{agnn_forward.1} parent=0 // pred_fallthru
    _
  // Predicated region
  $region18: #{agnn_forward.1} parent=0 // pred_check
    _
  $region19: #{agnn_forward.1} parent=0 // pred_check_branch
    %347 = sbr.rel (0) target = $region21
  $region20: #{agnn_forward.1} parent=0 // pred_region
    _
  $region21: #{agnn_forward.1} parent=0 // pred_fallthru
    _

</llo_original>
